<compile_context>
chip_gen: v7x
topology: tpu7x:2x2x1
jax: 0.10.0
libtpu: 0.0.40
codegen_flags: <defaults>
</compile_context>

<pallas_src>
import jax
import jax.numpy as jnp
from jax.experimental import pallas as pl
from jax.experimental.pallas import tpu as pltpu

N, C_IN, H, W = 2, 4, 16, 16          # small synthetic shapes
FEAT = 16                              # backbone output channels (per module)
N_HEADS = 4                            # pos, cos, sin, width
HEAD_NAMES = ("pos", "cos", "sin", "width")      # PyTorch output order
STACK_ORDER = ("pos", "width", "cos", "sin")     # ReLU heads first, Tanh heads last
RELU_ROWS = 2 * FEAT                   # rows 0..31 -> ReLU, rows 32..63 -> Tanh


def _ggcnn3_kernel(x_ref, wf_ref, bf_ref, w1_ref, b1_ref, w2_ref, b2_ref, out_ref):
    x = x_ref[0]                                           # (C_IN, HW)

    # Stand-in backbone: 1x1 conv C_IN->16 + ReLU  (see TODO(synk) above)
    f = jnp.dot(wf_ref[...], x, preferred_element_type=jnp.float32) + bf_ref[...]
    f = jnp.maximum(f, 0.0)

    # First 1x1 conv of all 4 heads stacked along output channels, with the
    # eval-mode BatchNorm already folded into w1/b1:  (64,16) @ (16,HW)
    h = jnp.dot(w1_ref[...], f, preferred_element_type=jnp.float32) + b1_ref[...]

    # Per-head activation with a static, sublane-aligned split:
    # rows 0..31 = pos/width (ReLU), rows 32..63 = cos/sin (Tanh).
    h = jnp.concatenate(
        [jnp.maximum(h[:RELU_ROWS], 0.0), jnp.tanh(h[RELU_ROWS:])], axis=0)

    # Second 1x1 conv of all 4 heads as one block-diagonal matmul: (4,64)@(64,HW)
    out_ref[0] = jnp.dot(w2_ref[...], h,
                         preferred_element_type=jnp.float32) + b2_ref[...]


def ggcnn3_forward(x_nchw, params):
    n, c, hh, ww = x_nchw.shape
    hw = hh * ww
    assert hw % 128 == 0, "pixel axis per image must be lane-dense (multiple of 128)"

    # Pure reshape (no transpose, no extra HBM round trip): (N,C,H,W)->(N,C,H*W)
    x_flat = x_nchw.reshape(n, c, hw)

    wf, bf, w1, b1, w2, b2 = params
    full = lambda a: pl.BlockSpec(a.shape, lambda i: (0,) * a.ndim)

    out = pl.pallas_call(
        _ggcnn3_kernel,
        out_shape=jax.ShapeDtypeStruct((n, N_HEADS, hw), jnp.float32),
        grid_spec=pltpu.PrefetchScalarGridSpec(
            num_scalar_prefetch=0,
            grid=(n,),                                   # one image per grid step
            in_specs=[
                pl.BlockSpec((1, c, hw), lambda i: (i, 0, 0)),   # x (per image)
                full(wf), full(bf),                              # backbone stand-in
                full(w1), full(b1),                              # heads conv1 (BN folded)
                full(w2), full(b2),                              # heads conv2 (block-diag)
            ],
            out_specs=pl.BlockSpec((1, N_HEADS, hw), lambda i: (i, 0, 0)),
        ),
        compiler_params=pltpu.CompilerParams(
            dimension_semantics=("parallel",)),          # 2 parallel points -> both v7x TCs
    )(x_flat, wf, bf, w1, b1, w2, b2)

    # (N, 4, HW) -> four NCHW tensors (N, 1, H, W), PyTorch head order.
    out = out.reshape(n, N_HEADS, hh, ww)
    pos_out = out[:, 0:1]
    cos_out = out[:, 1:2]
    sin_out = out[:, 2:3]
    width_out = out[:, 3:4]
    return pos_out, cos_out, sin_out, width_out


def make_params(key):
    ks = jax.random.split(key, 2 + N_HEADS)

    # Stand-in backbone (1x1 conv C_IN -> 16)
    wf = jax.random.normal(ks[0], (FEAT, C_IN), jnp.float32) * 0.1
    bf = jax.random.normal(ks[1], (FEAT, 1), jnp.float32) * 0.1

    # Four heads: Conv2d(16,16,1) -> BN(16) -> act -> Conv2d(16,1,1)
    eps = 1e-5
    heads = {}
    for idx, name in enumerate(HEAD_NAMES):
        kk = jax.random.split(ks[2 + idx], 8)
        w1 = jax.random.normal(kk[0], (FEAT, FEAT), jnp.float32) * 0.1
        b1 = jax.random.normal(kk[1], (FEAT,), jnp.float32) * 0.1
        gamma = 1.0 + 0.1 * jax.random.normal(kk[2], (FEAT,), jnp.float32)
        beta = 0.1 * jax.random.normal(kk[3], (FEAT,), jnp.float32)
        r_mean = 0.1 * jax.random.normal(kk[4], (FEAT,), jnp.float32)
        r_var = jnp.abs(1.0 + 0.1 * jax.random.normal(kk[5], (FEAT,), jnp.float32))
        w2 = jax.random.normal(kk[6], (1, FEAT), jnp.float32) * 0.1
        b2 = jax.random.normal(kk[7], (1,), jnp.float32) * 0.1

        # Fold eval-mode BatchNorm into the conv1 weights/bias.
        sc = gamma / jnp.sqrt(r_var + eps)
        sh = beta - r_mean * sc
        w1_folded = w1 * sc[:, None]
        b1_folded = b1 * sc + sh
        heads[name] = (w1_folded, b1_folded, w2, b2)

    # Stack conv1 so ReLU heads (pos, width) are rows 0..31 and Tanh heads
    # (cos, sin) are rows 32..63 (sublane-aligned activation split).
    w1_all = jnp.concatenate([heads[nm][0] for nm in STACK_ORDER], axis=0)     # (64, 16)
    b1_all = jnp.concatenate([heads[nm][1] for nm in STACK_ORDER])[:, None]    # (64, 1)

    # Block-diagonal second-conv weight, output rows in PyTorch head order.
    w2_bd = jnp.zeros((N_HEADS, N_HEADS * FEAT), jnp.float32)
    for out_row, name in enumerate(HEAD_NAMES):
        col = STACK_ORDER.index(name) * FEAT
        w2_bd = w2_bd.at[out_row, col:col + FEAT].set(heads[name][2][0])
    b2_all = jnp.concatenate([heads[nm][3] for nm in HEAD_NAMES])[:, None]     # (4, 1)

    return (wf, bf, w1_all, b1_all, w2_bd, b2_all)


if __name__ == "__main__":
    key = jax.random.PRNGKey(0)
    kx, kp = jax.random.split(key)
    x = jax.random.normal(kx, (N, C_IN, H, W), jnp.float32)
    params = make_params(kp)

    pos_o, cos_o, sin_o, width_o = ggcnn3_forward(x, params)
    jax.block_until_ready((pos_o, cos_o, sin_o, width_o))

    assert pos_o.shape == (N, 1, H, W)
    assert cos_o.shape == (N, 1, H, W)
    assert sin_o.shape == (N, 1, H, W)
    assert width_o.shape == (N, 1, H, W)
    print("KERNEL_OK")
</pallas_src>

<mosaic_0001>
module attributes {stable_mosaic.version = 11 : i64} {
  func.func @_ggcnn3_kernel(%arg0: i32, %arg1: memref<1x4x256xf32, #tpu.memory_space<vmem>>, %arg2: memref<16x4xf32, #tpu.memory_space<vmem>>, %arg3: memref<16x1xf32, #tpu.memory_space<vmem>>, %arg4: memref<64x16xf32, #tpu.memory_space<vmem>>, %arg5: memref<64x1xf32, #tpu.memory_space<vmem>>, %arg6: memref<4x64xf32, #tpu.memory_space<vmem>>, %arg7: memref<4x1xf32, #tpu.memory_space<vmem>>, %arg8: memref<1x4x256xf32, #tpu.memory_space<vmem>>) attributes {dimension_semantics = [#tpu.dimension_semantics<parallel>], iteration_bounds = array<i64: 2>, scalar_prefetch = 0 : i64, scratch_operands = 0 : i64, tpu.core_type = #tpu.core_type<tc>, window_params = [{transform_indices = @transform_0, window_bounds = array<i64: 1, 4, 256>}, {pipeline_mode = #tpu.pipeline_mode<synchronous>, transform_indices = @transform_1, window_bounds = array<i64: 16, 4>}, {pipeline_mode = #tpu.pipeline_mode<synchronous>, transform_indices = @transform_2, window_bounds = array<i64: 16, 1>}, {pipeline_mode = #tpu.pipeline_mode<synchronous>, transform_indices = @transform_3, window_bounds = array<i64: 64, 16>}, {pipeline_mode = #tpu.pipeline_mode<synchronous>, transform_indices = @transform_4, window_bounds = array<i64: 64, 1>}, {pipeline_mode = #tpu.pipeline_mode<synchronous>, transform_indices = @transform_5, window_bounds = array<i64: 4, 64>}, {pipeline_mode = #tpu.pipeline_mode<synchronous>, transform_indices = @transform_6, window_bounds = array<i64: 4, 1>}, {transform_indices = @transform_7, window_bounds = array<i64: 1, 4, 256>}]} {
    %c0 = arith.constant 0 : index
    %c0_0 = arith.constant 0 : index
    %c0_1 = arith.constant 0 : index
    %0 = vector.load %arg1[%c0, %c0_0, %c0_1] : memref<1x4x256xf32, #tpu.memory_space<vmem>>, vector<1x4x256xf32>
    %1 = vector.shape_cast %0 : vector<1x4x256xf32> to vector<4x256xf32>
    %c0_2 = arith.constant 0 : index
    %c0_3 = arith.constant 0 : index
    %2 = vector.load %arg2[%c0_2, %c0_3] : memref<16x4xf32, #tpu.memory_space<vmem>>, vector<16x4xf32>
    %cst = arith.constant dense<0.000000e+00> : vector<16x256xf32>
    %3 = tpu.matmul %2, %1, %cst {dimension_numbers = #tpu.dot_dimension_numbers<[1], [0], [0], [1], [0, 0, 1, 1], [], []>} : vector<16x4xf32>, vector<4x256xf32>, vector<16x256xf32> -> vector<16x256xf32>
    %c0_4 = arith.constant 0 : index
    %c0_5 = arith.constant 0 : index
    %4 = vector.load %arg3[%c0_4, %c0_5] : memref<16x1xf32, #tpu.memory_space<vmem>>, vector<16x1xf32>
    %5 = vector.broadcast %4 : vector<16x1xf32> to vector<16x256xf32>
    %6 = arith.addf %3, %5 : vector<16x256xf32>
    %cst_6 = arith.constant 0.000000e+00 : f32
    %7 = vector.broadcast %cst_6 : f32 to vector<16x256xf32>
    %8 = arith.maximumf %6, %7 : vector<16x256xf32>
    %c0_7 = arith.constant 0 : index
    %c0_8 = arith.constant 0 : index
    %9 = vector.load %arg4[%c0_7, %c0_8] : memref<64x16xf32, #tpu.memory_space<vmem>>, vector<64x16xf32>
    %cst_9 = arith.constant dense<0.000000e+00> : vector<64x256xf32>
    %10 = tpu.matmul %9, %8, %cst_9 {dimension_numbers = #tpu.dot_dimension_numbers<[1], [0], [0], [1], [0, 0, 1, 1], [], []>} : vector<64x16xf32>, vector<16x256xf32>, vector<64x256xf32> -> vector<64x256xf32>
    %c0_10 = arith.constant 0 : index
    %c0_11 = arith.constant 0 : index
    %11 = vector.load %arg5[%c0_10, %c0_11] : memref<64x1xf32, #tpu.memory_space<vmem>>, vector<64x1xf32>
    %12 = vector.broadcast %11 : vector<64x1xf32> to vector<64x256xf32>
    %13 = arith.addf %10, %12 : vector<64x256xf32>
    %14 = vector.extract_strided_slice %13 {offsets = [0, 0], sizes = [32, 256], strides = [1, 1]} : vector<64x256xf32> to vector<32x256xf32>
    %cst_12 = arith.constant 0.000000e+00 : f32
    %15 = vector.broadcast %cst_12 : f32 to vector<32x256xf32>
    %16 = arith.maximumf %14, %15 : vector<32x256xf32>
    %17 = vector.extract_strided_slice %13 {offsets = [32, 0], sizes = [32, 256], strides = [1, 1]} : vector<64x256xf32> to vector<32x256xf32>
    %18 = math.tanh %17 : vector<32x256xf32>
    %19 = tpu.concatenate %16, %18 in 0 : vector<32x256xf32>, vector<32x256xf32> -> vector<64x256xf32>
    %c0_13 = arith.constant 0 : index
    %c0_14 = arith.constant 0 : index
    %20 = vector.load %arg6[%c0_13, %c0_14] : memref<4x64xf32, #tpu.memory_space<vmem>>, vector<4x64xf32>
    %cst_15 = arith.constant dense<0.000000e+00> : vector<4x256xf32>
    %21 = tpu.matmul %20, %19, %cst_15 {dimension_numbers = #tpu.dot_dimension_numbers<[1], [0], [0], [1], [0, 0, 1, 1], [], []>} : vector<4x64xf32>, vector<64x256xf32>, vector<4x256xf32> -> vector<4x256xf32>
    %c0_16 = arith.constant 0 : index
    %c0_17 = arith.constant 0 : index
    %22 = vector.load %arg7[%c0_16, %c0_17] : memref<4x1xf32, #tpu.memory_space<vmem>>, vector<4x1xf32>
    %23 = vector.broadcast %22 : vector<4x1xf32> to vector<4x256xf32>
    %24 = arith.addf %21, %23 : vector<4x256xf32>
    %c0_18 = arith.constant 0 : index
    %c0_19 = arith.constant 0 : index
    %c0_20 = arith.constant 0 : index
    %25 = vector.load %arg8[%c0_18, %c0_19, %c0_20] : memref<1x4x256xf32, #tpu.memory_space<vmem>>, vector<1x4x256xf32>
    %26 = vector.shape_cast %25 : vector<1x4x256xf32> to vector<4x256xf32>
    %27 = vector.shape_cast %24 : vector<4x256xf32> to vector<1x4x256xf32>
    tpu.vector_store %arg8[%c0_18, %c0_19, %c0_20], %27 {strides = array<i32>} : memref<1x4x256xf32, #tpu.memory_space<vmem>>, vector<1x4x256xf32>,
    return
  }
  func.func @transform_0(%arg0: i32) -> (i32, i32, i32) {
    %c0_i32 = arith.constant 0 : i32
    %c0_i32_0 = arith.constant 0 : i32
    %c0_i32_1 = arith.constant 0 : i32
    return %arg0, %c0_i32, %c0_i32_0 : i32, i32, i32
  }
  func.func @transform_1(%arg0: i32) -> (i32, i32) {
    %c0_i32 = arith.constant 0 : i32
    %c0_i32_0 = arith.constant 0 : i32
    %c0_i32_1 = arith.constant 0 : i32
    return %c0_i32, %c0_i32_0 : i32, i32
  }
  func.func @transform_2(%arg0: i32) -> (i32, i32) {
    %c0_i32 = arith.constant 0 : i32
    %c0_i32_0 = arith.constant 0 : i32
    %c0_i32_1 = arith.constant 0 : i32
    return %c0_i32, %c0_i32_0 : i32, i32
  }
  func.func @transform_3(%arg0: i32) -> (i32, i32) {
    %c0_i32 = arith.constant 0 : i32
    %c0_i32_0 = arith.constant 0 : i32
    %c0_i32_1 = arith.constant 0 : i32
    return %c0_i32, %c0_i32_0 : i32, i32
  }
  func.func @transform_4(%arg0: i32) -> (i32, i32) {
    %c0_i32 = arith.constant 0 : i32
    %c0_i32_0 = arith.constant 0 : i32
    %c0_i32_1 = arith.constant 0 : i32
    return %c0_i32, %c0_i32_0 : i32, i32
  }
  func.func @transform_5(%arg0: i32) -> (i32, i32) {
    %c0_i32 = arith.constant 0 : i32
    %c0_i32_0 = arith.constant 0 : i32
    %c0_i32_1 = arith.constant 0 : i32
    return %c0_i32, %c0_i32_0 : i32, i32
  }
  func.func @transform_6(%arg0: i32) -> (i32, i32) {
    %c0_i32 = arith.constant 0 : i32
    %c0_i32_0 = arith.constant 0 : i32
    %c0_i32_1 = arith.constant 0 : i32
    return %c0_i32, %c0_i32_0 : i32, i32
  }
  func.func @transform_7(%arg0: i32) -> (i32, i32, i32) {
    %c0_i32 = arith.constant 0 : i32
    %c0_i32_0 = arith.constant 0 : i32
    %c0_i32_1 = arith.constant 0 : i32
    return %arg0, %c0_i32, %c0_i32_0 : i32, i32, i32
  }
}

</mosaic_0001>

<llo_original>
// kernel: tpu_custom_call.1
$region0: #{tpu_custom_call.1}
  #allocation0 [shape = 'u32[]', space=smem, size = 0x4, offset = 0x4, fixed_abs, tag = 'smem constant byte address 0x4 - core index']
  #allocation1 [shape = 'u32[144,128]{1,0:T(1,128)}', space=vmem, size = 0x12000, scoped, tag = 'internal scratch']
  %s0 = inlined_call_operand.vmem [shape: f32[2,4,256], index: 0, kind: input, shape index: {}]
  %s1 = inlined_call_operand.vmem [shape: f32[16,4], index: 1, kind: input, shape index: {}]
  %s2 = inlined_call_operand.vmem [shape: f32[16,1], index: 2, kind: input, shape index: {}]
  %s3 = inlined_call_operand.vmem [shape: f32[64,16], index: 3, kind: input, shape index: {}]
  %s4 = inlined_call_operand.vmem [shape: f32[64,1], index: 4, kind: input, shape index: {}]
  %s5 = inlined_call_operand.vmem [shape: f32[4,64], index: 5, kind: input, shape index: {}]
  %s6 = inlined_call_operand.vmem [shape: f32[4,1], index: 6, kind: input, shape index: {}]
  %s7 = inlined_call_operand.hbm [shape: f32[2,4,256], index: 7, kind: output, shape index: {}]
  %s8 = sld [smem:[#allocation0]]
  $region61: #{tpu_custom_call.1} parent=0
    _
  %s10 = ssub.s32 1, %s8
  %s11 = scalar_select 0, %s10, %s8
  $region1: #{tpu_custom_call.1} parent=0
    #allocation2 [shape = 'u8[8192]{0}', space=vmem, size = 0x2000, scoped, tag = 'output window, operand 0']
    #allocation3 [shape = 's32[2]{0}', space=sflag, size = 0x8, scoped, tag = 'scoped memory for tpu_custom_call.1']
    %12 = vsyncpa [#allocation3], 0
    %s13 = scalar_lea.sflag [#allocation3], 1
    %14 = vsyncpa %s13, 0
    loop: start=0, step=1, limit=4
    $region2: #{tpu_custom_call.1} parent=1 // loop_pre_header
      _
    $region3: #{tpu_custom_call.1} parent=1 // loop_header
      %s16 = sphi 0, %s20
      %p17 = scmp.ge.s32.totalorder %s16, 4
      %s26 = sphi 0, %s28
      %s29 = sphi 0, %s26
      %s30 = sphi 0, %s29
      %s46 = sphi 0, %s30
      %s50 = sphi 0, %s50
      %s52 = sphi 0, %s50
      %s53 = sphi 0, %s52
      %s67 = sphi 0, %s53
      %s71 = sphi 0, %s71
      %s73 = sphi 0, %s71
      %s74 = sphi 0, %s73
      %s88 = sphi 0, %s74
      %s92 = sphi 0, %s92
      %s94 = sphi 0, %s92
      %s95 = sphi 0, %s94
      %s109 = sphi 0, %s95
      %s113 = sphi 0, %s113
      %s115 = sphi 0, %s113
      %s116 = sphi 0, %s115
      %s130 = sphi 0, %s116
      %s134 = sphi 0, %s134
      %s136 = sphi 0, %s134
      %s137 = sphi 0, %s136
      %s151 = sphi 0, %s137
      %s155 = sphi 0, %s155
      %s157 = sphi 0, %s155
      %s158 = sphi 0, %s157
      %s172 = sphi 0, %s158
      %s178 = sphi 0, %s180
      %s181 = sphi 0, %s178
      %s182 = sphi 0, %s181
      %s198 = sphi 0, %s182
    $region4: #{tpu_custom_call.1} parent=1 // loop_header_branch
      %19 = sbr.rel (%p17) target = $region8
    $region5: #{tpu_custom_call.1} parent=1 // loop_body
      %s21 = ssub.s32 %s16, 1
      %s22 = ssub.s32 %s16, 2
      %s23 = sadd.s32 %s16, 1
      %s24 = ssub.s32 %s16, %s23
      %p25 = scmp.eq.s32.totalorder %s24, 0
      %s27 = sadd.s32 %s26, 1
      %s28 = scalar_select %p25, %s26, %s27
      %p31 = pneg %p25
      %p32 = scmp.eq.s32.totalorder %s16, 1
      %p33 = por %p31, %p32
      %p34 = scmp.ne.s32.totalorder %s26, %s29
      %p35 = scmp.eq.s32.totalorder %s16, 0
      %p36 = por %p34, %p35
      %p37 = scmp.ne.s32.totalorder %s26, %s29
      %p38 = scmp.eq.s32.totalorder %s21, 1
      %p39 = por %p37, %p38
      %p40 = scmp.ne.s32.totalorder %s29, %s30
      %p41 = scmp.eq.s32.totalorder %s21, 0
      %p42 = por %p40, %p41
      %p43 = scmp.ne.s32.totalorder %s29, %s30
      %p44 = scmp.eq.s32.totalorder %s22, 1
      %p45 = por %p43, %p44
      %p47 = scmp.ne.s32.totalorder %s30, %s46
      %p48 = scmp.eq.s32.totalorder %s22, 0
      %p49 = por %p47, %p48
      %s51 = sadd.s32 %s50, 1
      %p54 = scmp.eq.s32.totalorder %s16, 1
      %p55 = scmp.ne.s32.totalorder %s50, %s52
      %p56 = scmp.eq.s32.totalorder %s16, 0
      %p57 = por %p55, %p56
      %p58 = scmp.ne.s32.totalorder %s50, %s52
      %p59 = scmp.eq.s32.totalorder %s21, 1
      %p60 = por %p58, %p59
      %p61 = scmp.ne.s32.totalorder %s52, %s53
      %p62 = scmp.eq.s32.totalorder %s21, 0
      %p63 = por %p61, %p62
      %p64 = scmp.ne.s32.totalorder %s52, %s53
      %p65 = scmp.eq.s32.totalorder %s22, 1
      %p66 = por %p64, %p65
      %p68 = scmp.ne.s32.totalorder %s53, %s67
      %p69 = scmp.eq.s32.totalorder %s22, 0
      %p70 = por %p68, %p69
      %s72 = sadd.s32 %s71, 1
      %p75 = scmp.eq.s32.totalorder %s16, 1
      %p76 = scmp.ne.s32.totalorder %s71, %s73
      %p77 = scmp.eq.s32.totalorder %s16, 0
      %p78 = por %p76, %p77
      %p79 = scmp.ne.s32.totalorder %s71, %s73
      %p80 = scmp.eq.s32.totalorder %s21, 1
      %p81 = por %p79, %p80
      %p82 = scmp.ne.s32.totalorder %s73, %s74
      %p83 = scmp.eq.s32.totalorder %s21, 0
      %p84 = por %p82, %p83
      %p85 = scmp.ne.s32.totalorder %s73, %s74
      %p86 = scmp.eq.s32.totalorder %s22, 1
      %p87 = por %p85, %p86
      %p89 = scmp.ne.s32.totalorder %s74, %s88
      %p90 = scmp.eq.s32.totalorder %s22, 0
      %p91 = por %p89, %p90
      %s93 = sadd.s32 %s92, 1
      %p96 = scmp.eq.s32.totalorder %s16, 1
      %p97 = scmp.ne.s32.totalorder %s92, %s94
      %p98 = scmp.eq.s32.totalorder %s16, 0
      %p99 = por %p97, %p98
      %p100 = scmp.ne.s32.totalorder %s92, %s94
      %p101 = scmp.eq.s32.totalorder %s21, 1
      %p102 = por %p100, %p101
      %p103 = scmp.ne.s32.totalorder %s94, %s95
      %p104 = scmp.eq.s32.totalorder %s21, 0
      %p105 = por %p103, %p104
      %p106 = scmp.ne.s32.totalorder %s94, %s95
      %p107 = scmp.eq.s32.totalorder %s22, 1
      %p108 = por %p106, %p107
      %p110 = scmp.ne.s32.totalorder %s95, %s109
      %p111 = scmp.eq.s32.totalorder %s22, 0
      %p112 = por %p110, %p111
      %s114 = sadd.s32 %s113, 1
      %p117 = scmp.eq.s32.totalorder %s16, 1
      %p118 = scmp.ne.s32.totalorder %s113, %s115
      %p119 = scmp.eq.s32.totalorder %s16, 0
      %p120 = por %p118, %p119
      %p121 = scmp.ne.s32.totalorder %s113, %s115
      %p122 = scmp.eq.s32.totalorder %s21, 1
      %p123 = por %p121, %p122
      %p124 = scmp.ne.s32.totalorder %s115, %s116
      %p125 = scmp.eq.s32.totalorder %s21, 0
      %p126 = por %p124, %p125
      %p127 = scmp.ne.s32.totalorder %s115, %s116
      %p128 = scmp.eq.s32.totalorder %s22, 1
      %p129 = por %p127, %p128
      %p131 = scmp.ne.s32.totalorder %s116, %s130
      %p132 = scmp.eq.s32.totalorder %s22, 0
      %p133 = por %p131, %p132
      %s135 = sadd.s32 %s134, 1
      %p138 = scmp.eq.s32.totalorder %s16, 1
      %p139 = scmp.ne.s32.totalorder %s134, %s136
      %p140 = scmp.eq.s32.totalorder %s16, 0
      %p141 = por %p139, %p140
      %p142 = scmp.ne.s32.totalorder %s134, %s136
      %p143 = scmp.eq.s32.totalorder %s21, 1
      %p144 = por %p142, %p143
      %p145 = scmp.ne.s32.totalorder %s136, %s137
      %p146 = scmp.eq.s32.totalorder %s21, 0
      %p147 = por %p145, %p146
      %p148 = scmp.ne.s32.totalorder %s136, %s137
      %p149 = scmp.eq.s32.totalorder %s22, 1
      %p150 = por %p148, %p149
      %p152 = scmp.ne.s32.totalorder %s137, %s151
      %p153 = scmp.eq.s32.totalorder %s22, 0
      %p154 = por %p152, %p153
      %s156 = sadd.s32 %s155, 1
      %p159 = scmp.eq.s32.totalorder %s16, 1
      %p160 = scmp.ne.s32.totalorder %s155, %s157
      %p161 = scmp.eq.s32.totalorder %s16, 0
      %p162 = por %p160, %p161
      %p163 = scmp.ne.s32.totalorder %s155, %s157
      %p164 = scmp.eq.s32.totalorder %s21, 1
      %p165 = por %p163, %p164
      %p166 = scmp.ne.s32.totalorder %s157, %s158
      %p167 = scmp.eq.s32.totalorder %s21, 0
      %p168 = por %p166, %p167
      %p169 = scmp.ne.s32.totalorder %s157, %s158
      %p170 = scmp.eq.s32.totalorder %s22, 1
      %p171 = por %p169, %p170
      %p173 = scmp.ne.s32.totalorder %s158, %s172
      %p174 = scmp.eq.s32.totalorder %s22, 0
      %p175 = por %p173, %p174
      %s176 = ssub.s32 %s16, %s23
      %p177 = scmp.eq.s32.totalorder %s176, 0
      %s179 = sadd.s32 %s178, 1
      %s180 = scalar_select %p177, %s178, %s179
      %p183 = pneg %p177
      %p184 = scmp.eq.s32.totalorder %s16, 1
      %p185 = por %p183, %p184
      %p186 = scmp.ne.s32.totalorder %s178, %s181
      %p187 = scmp.eq.s32.totalorder %s16, 0
      %p188 = por %p186, %p187
      %p189 = scmp.ne.s32.totalorder %s178, %s181
      %p190 = scmp.eq.s32.totalorder %s21, 1
      %p191 = por %p189, %p190
      %p192 = scmp.ne.s32.totalorder %s181, %s182
      %p193 = scmp.eq.s32.totalorder %s21, 0
      %p194 = por %p192, %p193
      %p195 = scmp.ne.s32.totalorder %s181, %s182
      %p196 = scmp.eq.s32.totalorder %s22, 1
      %p197 = por %p195, %p196
      %p199 = scmp.ne.s32.totalorder %s182, %s198
      %p200 = scmp.eq.s32.totalorder %s22, 0
      %p201 = por %p199, %p200
      %p202 = scmp.le.s32.totalorder 1, %s16
      %p203 = scmp.lt.s32.totalorder %s16, 3
      %p204 = pnand %p202, %p203
      %p205 = pneg %p204
      // Predicated region
      $region9: #{tpu_custom_call.1} parent=5 // pred_check
        _
      $region10: #{tpu_custom_call.1} parent=5 // pred_check_branch
        %207 = sbr.rel (%p204) target = $region12
      $region11: #{tpu_custom_call.1} parent=5 // pred_region
        %s208 = ssub.s32 %s16, 1
        // Predicated region
        $region13: #{tpu_custom_call.1} parent=11 // pred_check
          %p209 = pneg %p63
        $region14: #{tpu_custom_call.1} parent=11 // pred_check_branch
          %211 = sbr.rel (%p209) target = $region16
        $region15: #{tpu_custom_call.1} parent=11 // pred_region
          _
        $region16: #{tpu_custom_call.1} parent=11 // pred_fallthru
          _
        // Predicated region
        $region17: #{tpu_custom_call.1} parent=11 // pred_check
          %p212 = pneg %p84
        $region18: #{tpu_custom_call.1} parent=11 // pred_check_branch
          %214 = sbr.rel (%p212) target = $region20
        $region19: #{tpu_custom_call.1} parent=11 // pred_region
          _
        $region20: #{tpu_custom_call.1} parent=11 // pred_fallthru
          _
        // Predicated region
        $region21: #{tpu_custom_call.1} parent=11 // pred_check
          %p215 = pneg %p105
        $region22: #{tpu_custom_call.1} parent=11 // pred_check_branch
          %217 = sbr.rel (%p215) target = $region24
        $region23: #{tpu_custom_call.1} parent=11 // pred_region
          _
        $region24: #{tpu_custom_call.1} parent=11 // pred_fallthru
          _
        // Predicated region
        $region25: #{tpu_custom_call.1} parent=11 // pred_check
          %p218 = pneg %p126
        $region26: #{tpu_custom_call.1} parent=11 // pred_check_branch
          %220 = sbr.rel (%p218) target = $region28
        $region27: #{tpu_custom_call.1} parent=11 // pred_region
          _
        $region28: #{tpu_custom_call.1} parent=11 // pred_fallthru
          _
        // Predicated region
        $region29: #{tpu_custom_call.1} parent=11 // pred_check
          %p221 = pneg %p147
        $region30: #{tpu_custom_call.1} parent=11 // pred_check_branch
          %223 = sbr.rel (%p221) target = $region32
        $region31: #{tpu_custom_call.1} parent=11 // pred_region
          _
        $region32: #{tpu_custom_call.1} parent=11 // pred_fallthru
          _
        // Predicated region
        $region33: #{tpu_custom_call.1} parent=11 // pred_check
          %p224 = pneg %p168
        $region34: #{tpu_custom_call.1} parent=11 // pred_check_branch
          %226 = sbr.rel (%p224) target = $region36
        $region35: #{tpu_custom_call.1} parent=11 // pred_region
          _
        $region36: #{tpu_custom_call.1} parent=11 // pred_fallthru
          _
      $region12: #{tpu_custom_call.1} parent=5 // pred_fallthru
        _
      %p227 = scmp.lt.s32.totalorder %s16, 2
      // Predicated region
      $region37: #{tpu_custom_call.1} parent=5 // pred_check
        %p228 = pneg %p227
      $region38: #{tpu_custom_call.1} parent=5 // pred_check_branch
        %230 = sbr.rel (%p228) target = $region40
      $region39: #{tpu_custom_call.1} parent=5 // pred_region
        // Predicated region
        $region41: #{tpu_custom_call.1} parent=39 // pred_check
          %p231 = pneg %p36
        $region42: #{tpu_custom_call.1} parent=39 // pred_check_branch
          %233 = sbr.rel (%p231) target = $region44
        $region43: #{tpu_custom_call.1} parent=39 // pred_region
          %p234 = scmp.lt.s32.totalorder %s16, 1
          %s235 = scalar_select %p234, %s16, 1
          %s236 = smul.addr %s235, 2
          %s237 = smul.addr %s236, 4
          %s238 = scalar_lea.vmem %s0, %s237
        $region44: #{tpu_custom_call.1} parent=39 // pred_fallthru
          _
      $region40: #{tpu_custom_call.1} parent=5 // pred_fallthru
        _
      %p239 = scmp.le.s32.totalorder 1, %s16
      %p240 = scmp.lt.s32.totalorder %s16, 3
      %p241 = pnand %p239, %p240
      %p242 = pneg %p241
      // Predicated region
      $region45: #{tpu_custom_call.1} parent=5 // pred_check
        _
      $region46: #{tpu_custom_call.1} parent=5 // pred_check_branch
        %244 = sbr.rel (%p241) target = $region48
      $region47: #{tpu_custom_call.1} parent=5 // pred_region
        %s245 = ssub.s32 %s16, 1
        %p246 = scmp.lt.s32.totalorder %s21, 1
        %s247 = scalar_select %p246, %s21, 1
        %s248 = smul.addr %s247, 2
        %s249 = smul.addr %s248, 4
        %s250 = scalar_lea.vmem %s0, %s249
        %p251 = pneg %p42
        %p252 = pneg %p39
        %p253 = pneg %p63
        %p254 = pneg %p60
        %p255 = pneg %p84
        %p256 = pneg %p81
        %p257 = pneg %p105
        %p258 = pneg %p102
        %p259 = pneg %p126
        %p260 = pneg %p123
        %p261 = pneg %p147
        %p262 = pneg %p144
        %p263 = pneg %p168
        %p264 = pneg %p165
        %p265 = pneg %p194
        %p266 = pneg %p191
        %s267 = sand.u32 %s181, 1
        %s268 = scalar_lea.sflag [#allocation3], %s267
        %s269 = sand.u32 %s181, 1
        %s270 = smul.addr %s269, 8
        %s271 = scalar_lea.vmem [#allocation2], %s270
        %p272 = scmp.lt.s32.totalorder %s21, 1
        %s273 = scalar_select %p272, %s21, 1
        %s274 = smul.addr %s273, 2
        %s275 = smul.addr %s274, 4
        %s276 = scalar_lea.vmem %s0, %s275
        %v277 = vld [vmem:[%s276] sm:$0xff]
        %v278 = vld [vmem:[%s1] sm:$0xff]
        %v279 = vld [vmem:[%s1 + $0x8] sm:$0xff]
        %v280 = vld [vmem:[%s2] sm:$0xff]
        %v281 = vld [vmem:[%s2 + $0x8] sm:$0xff]
        %283 = vset.pattern.permute.xlu0 0
        %284 = vperm.xlu0 %283, %v280
        %v285 = vpop.permute.xlu0 %284
        %288 = vset.pattern.permute.xlu0 0
        %289 = vperm.xlu0 %288, %v281
        %v290 = vpop.permute.xlu0 %289
        %v293 = vcombine.high %v277, %v277
        %vm294 = vcmask 31744
        %v296 = vsel %vm294, %v278, 0
        %v299 = vsel %vm294, %v279, 0
        %vm301 = vcmask 1043456
        %v302 = vsel %vm301, %v277, 0
        %v304 = vsel %vm301, %v293, 0
        %306 = vmatprep.subr.mxu0 %v304
        %307 = vmatpush1.msra.mxu0 %v302
        %308 = vmatprep.subr.mxu0 0.0
        %309 = vmatpush1.msra.mxu0 0.0
        %310 = vmatprep.subr.mxu0 0.0
        %311 = vmatpush1.msra.mxu0 0.0
        %312 = vmatprep.subr.mxu0 0.0
        %313 = vmatpush1.msra.mxu0 0.0
        %314 = vmatprep.subr.mxu0 0.0
        %315 = vmatpush1.msra.mxu0 0.0
        %316 = vmatprep.subr.mxu0 0.0
        %317 = vmatpush1.msra.mxu0 0.0
        %318 = vmatprep.subr.mxu0 0.0
        %319 = vmatpush1.msra.mxu0 0.0
        %320 = vmatprep.subr.mxu0 0.0
        %321 = vmatpush1.msra.mxu0 0.0
        %322 = vmatprep.subr.mxu0 0.0
        %323 = vmatpush1.msra.mxu0 0.0
        %324 = vmatprep.subr.mxu0 0.0
        %325 = vmatpush1.msra.mxu0 0.0
        %326 = vmatprep.subr.mxu0 0.0
        %327 = vmatpush1.msra.mxu0 0.0
        %328 = vmatprep.subr.mxu0 0.0
        %329 = vmatpush1.msra.mxu0 0.0
        %330 = vmatprep.subr.mxu0 0.0
        %331 = vmatpush1.msra.mxu0 0.0
        %332 = vmatprep.subr.mxu0 0.0
        %333 = vmatpush1.msra.mxu0 0.0
        %334 = vmatprep.subr.mxu0 0.0
        %335 = vmatpush1.msra.mxu0 0.0
        %336 = vmatprep.subr.mxu0 0.0
        %337 = vmatpush1.msra.mxu0 0.0
        %338 = vmatprep.subr.mxu0 0.0
        %339 = vmatpush1.msra.mxu0 0.0
        %340 = vmatprep.subr.mxu0 0.0
        %341 = vmatpush1.msra.mxu0 0.0
        %342 = vmatprep.subr.mxu0 0.0
        %343 = vmatpush1.msra.mxu0 0.0
        %344 = vmatprep.subr.mxu0 0.0
        %345 = vmatpush1.msra.mxu0 0.0
        %346 = vmatprep.subr.mxu0 0.0
        %347 = vmatpush1.msra.mxu0 0.0
        %348 = vmatprep.subr.mxu0 0.0
        %349 = vmatpush1.msra.mxu0 0.0
        %350 = vmatprep.subr.mxu0 0.0
        %351 = vmatpush1.msra.mxu0 0.0
        %352 = vmatprep.subr.mxu0 0.0
        %353 = vmatpush1.msra.mxu0 0.0
        %354 = vmatprep.subr.mxu0 0.0
        %355 = vmatpush1.msra.mxu0 0.0
        %356 = vmatprep.subr.mxu0 0.0
        %357 = vmatpush1.msra.mxu0 0.0
        %358 = vmatprep.subr.mxu0 0.0
        %359 = vmatpush1.msra.mxu0 0.0
        %360 = vmatprep.subr.mxu0 0.0
        %361 = vmatpush1.msra.mxu0 0.0
        %362 = vmatprep.subr.mxu0 0.0
        %363 = vmatpush1.msra.mxu0 0.0
        %364 = vmatprep.subr.mxu0 0.0
        %365 = vmatpush1.msra.mxu0 0.0
        %366 = vmatprep.subr.mxu0 0.0
        %367 = vmatpush1.msra.mxu0 0.0
        %368 = vmatprep.subr.mxu0 0.0
        %369 = vmatpush1.msra.mxu0 0.0
        %370 = vmatprep.mubr.f32.mxu0 0.0
        %371 = vmatmul.mubr.f32.gmra.mrb[0].mxu0 %v296
        %v372 = vpop.f32.mrb[0].mxu0
        %v373 = vadd.f32 %v285, %v372
        %v374 = vpop.f32.mrb[0].mxu0
        %v375 = vadd.f32 %v285, %v374
        %376 = vmatprep.mubr.f32.mxu0 0.0
        %377 = vmatmul.mubr.f32.gmra.mrb[0].mxu0 %v299
        %v378 = vpop.f32.mrb[0].mxu0
        %v379 = vadd.f32 %v290, %v378
        %v380 = vpop.f32.mrb[0].mxu0
        %v381 = vadd.f32 %v290, %v380
        %382 = vdwg.mxu0
        %v383 = vmax.f32 %v373, 0.0
        %v384 = vmax.f32 %v375, 0.0
        %v385 = vmax.f32 %v379, 0.0
        %v386 = vmax.f32 %v381, 0.0
        %v387 = vld [vmem:[%s3] sm:$0xff]
        %v388 = vld [vmem:[%s3 + $0x8] sm:$0xff]
        %v389 = vld [vmem:[%s3 + $0x10] sm:$0xff]
        %v390 = vld [vmem:[%s3 + $0x18] sm:$0xff]
        %v391 = vld [vmem:[%s3 + $0x20] sm:$0xff]
        %v392 = vld [vmem:[%s3 + $0x28] sm:$0xff]
        %v393 = vld [vmem:[%s3 + $0x30] sm:$0xff]
        %v394 = vld [vmem:[%s3 + $0x38] sm:$0xff]
        %v395 = vld [vmem:[%s4] sm:$0xff]
        %v396 = vld [vmem:[%s4 + $0x8] sm:$0xff]
        %v397 = vld [vmem:[%s4 + $0x10] sm:$0xff]
        %v398 = vld [vmem:[%s4 + $0x18] sm:$0xff]
        %v399 = vld [vmem:[%s4 + $0x20] sm:$0xff]
        %v400 = vld [vmem:[%s4 + $0x28] sm:$0xff]
        %v401 = vld [vmem:[%s4 + $0x30] sm:$0xff]
        %v402 = vld [vmem:[%s4 + $0x38] sm:$0xff]
        %404 = vset.pattern.permute.xlu0 0
        %405 = vperm.xlu0 %404, %v395
        %v406 = vpop.permute.xlu0 %405
        %409 = vset.pattern.permute.xlu0 0
        %410 = vperm.xlu0 %409, %v396
        %v411 = vpop.permute.xlu0 %410
        %414 = vset.pattern.permute.xlu0 0
        %415 = vperm.xlu0 %414, %v397
        %v416 = vpop.permute.xlu0 %415
        %419 = vset.pattern.permute.xlu0 0
        %420 = vperm.xlu0 %419, %v398
        %v421 = vpop.permute.xlu0 %420
        %424 = vset.pattern.permute.xlu0 0
        %425 = vperm.xlu0 %424, %v399
        %v426 = vpop.permute.xlu0 %425
        %429 = vset.pattern.permute.xlu0 0
        %430 = vperm.xlu0 %429, %v400
        %v431 = vpop.permute.xlu0 %430
        %434 = vset.pattern.permute.xlu0 0
        %435 = vperm.xlu0 %434, %v401
        %v436 = vpop.permute.xlu0 %435
        %439 = vset.pattern.permute.xlu0 0
        %440 = vperm.xlu0 %439, %v402
        %v441 = vpop.permute.xlu0 %440
        %vm443 = vcmask 130048
        %v445 = vsel %vm443, %v387, 0
        %v448 = vsel %vm443, %v388, 0
        %v451 = vsel %vm443, %v389, 0
        %v454 = vsel %vm443, %v390, 0
        %v457 = vsel %vm443, %v391, 0
        %v460 = vsel %vm443, %v392, 0
        %v463 = vsel %vm443, %v393, 0
        %v466 = vsel %vm443, %v394, 0
        %468 = vmatprep.subr.mxu0 %v384
        %469 = vmatpush1.msra.mxu0 %v383
        %470 = vmatprep.subr.mxu0 %v386
        %471 = vmatpush1.msra.mxu0 %v385
        %472 = vmatprep.subr.mxu0 0.0
        %473 = vmatpush1.msra.mxu0 0.0
        %474 = vmatprep.subr.mxu0 0.0
        %475 = vmatpush1.msra.mxu0 0.0
        %476 = vmatprep.subr.mxu0 0.0
        %477 = vmatpush1.msra.mxu0 0.0
        %478 = vmatprep.subr.mxu0 0.0
        %479 = vmatpush1.msra.mxu0 0.0
        %480 = vmatprep.subr.mxu0 0.0
        %481 = vmatpush1.msra.mxu0 0.0
        %482 = vmatprep.subr.mxu0 0.0
        %483 = vmatpush1.msra.mxu0 0.0
        %484 = vmatprep.subr.mxu0 0.0
        %485 = vmatpush1.msra.mxu0 0.0
        %486 = vmatprep.subr.mxu0 0.0
        %487 = vmatpush1.msra.mxu0 0.0
        %488 = vmatprep.subr.mxu0 0.0
        %489 = vmatpush1.msra.mxu0 0.0
        %490 = vmatprep.subr.mxu0 0.0
        %491 = vmatpush1.msra.mxu0 0.0
        %492 = vmatprep.subr.mxu0 0.0
        %493 = vmatpush1.msra.mxu0 0.0
        %494 = vmatprep.subr.mxu0 0.0
        %495 = vmatpush1.msra.mxu0 0.0
        %496 = vmatprep.subr.mxu0 0.0
        %497 = vmatpush1.msra.mxu0 0.0
        %498 = vmatprep.subr.mxu0 0.0
        %499 = vmatpush1.msra.mxu0 0.0
        %500 = vmatprep.subr.mxu0 0.0
        %501 = vmatpush1.msra.mxu0 0.0
        %502 = vmatprep.subr.mxu0 0.0
        %503 = vmatpush1.msra.mxu0 0.0
        %504 = vmatprep.subr.mxu0 0.0
        %505 = vmatpush1.msra.mxu0 0.0
        %506 = vmatprep.subr.mxu0 0.0
        %507 = vmatpush1.msra.mxu0 0.0
        %508 = vmatprep.subr.mxu0 0.0
        %509 = vmatpush1.msra.mxu0 0.0
        %510 = vmatprep.subr.mxu0 0.0
        %511 = vmatpush1.msra.mxu0 0.0
        %512 = vmatprep.subr.mxu0 0.0
        %513 = vmatpush1.msra.mxu0 0.0
        %514 = vmatprep.subr.mxu0 0.0
        %515 = vmatpush1.msra.mxu0 0.0
        %516 = vmatprep.subr.mxu0 0.0
        %517 = vmatpush1.msra.mxu0 0.0
        %518 = vmatprep.subr.mxu0 0.0
        %519 = vmatpush1.msra.mxu0 0.0
        %520 = vmatprep.subr.mxu0 0.0
        %521 = vmatpush1.msra.mxu0 0.0
        %522 = vmatprep.subr.mxu0 0.0
        %523 = vmatpush1.msra.mxu0 0.0
        %524 = vmatprep.subr.mxu0 0.0
        %525 = vmatpush1.msra.mxu0 0.0
        %526 = vmatprep.subr.mxu0 0.0
        %527 = vmatpush1.msra.mxu0 0.0
        %528 = vmatprep.subr.mxu0 0.0
        %529 = vmatpush1.msra.mxu0 0.0
        %530 = vmatprep.subr.mxu0 0.0
        %531 = vmatpush1.msra.mxu0 0.0
        %532 = vmatprep.mubr.f32.mxu0 0.0
        %533 = vmatmul.mubr.f32.gmra.mrb[0].mxu0 %v445
        %v534 = vpop.f32.mrb[0].mxu0
        %v535 = vadd.f32 %v406, %v534
        %v536 = vpop.f32.mrb[0].mxu0
        %v537 = vadd.f32 %v406, %v536
        %538 = vmatprep.mubr.f32.mxu0 0.0
        %539 = vmatmul.mubr.f32.gmra.mrb[0].mxu0 %v448
        %v540 = vpop.f32.mrb[0].mxu0
        %v541 = vadd.f32 %v411, %v540
        %v542 = vpop.f32.mrb[0].mxu0
        %v543 = vadd.f32 %v411, %v542
        %544 = vmatprep.mubr.f32.mxu0 0.0
        %545 = vmatmul.mubr.f32.gmra.mrb[0].mxu0 %v451
        %v546 = vpop.f32.mrb[0].mxu0
        %v547 = vadd.f32 %v416, %v546
        %v548 = vpop.f32.mrb[0].mxu0
        %v549 = vadd.f32 %v416, %v548
        %550 = vmatprep.mubr.f32.mxu0 0.0
        %551 = vmatmul.mubr.f32.gmra.mrb[0].mxu0 %v454
        %v552 = vpop.f32.mrb[0].mxu0
        %v553 = vadd.f32 %v421, %v552
        %v554 = vpop.f32.mrb[0].mxu0
        %v555 = vadd.f32 %v421, %v554
        %556 = vmatprep.mubr.f32.mxu0 0.0
        %557 = vmatmul.mubr.f32.gmra.mrb[0].mxu0 %v457
        %v558 = vpop.f32.mrb[0].mxu0
        %v559 = vadd.f32 %v426, %v558
        %v560 = vpop.f32.mrb[0].mxu0
        %v561 = vadd.f32 %v426, %v560
        %562 = vmatprep.mubr.f32.mxu0 0.0
        %563 = vmatmul.mubr.f32.gmra.mrb[0].mxu0 %v460
        %v564 = vpop.f32.mrb[0].mxu0
        %v565 = vadd.f32 %v431, %v564
        %v566 = vpop.f32.mrb[0].mxu0
        %v567 = vadd.f32 %v431, %v566
        %568 = vmatprep.mubr.f32.mxu0 0.0
        %569 = vmatmul.mubr.f32.gmra.mrb[0].mxu0 %v463
        %v570 = vpop.f32.mrb[0].mxu0
        %v571 = vadd.f32 %v436, %v570
        %v572 = vpop.f32.mrb[0].mxu0
        %v573 = vadd.f32 %v436, %v572
        %574 = vmatprep.mubr.f32.mxu0 0.0
        %575 = vmatmul.mubr.f32.gmra.mrb[0].mxu0 %v466
        %v576 = vpop.f32.mrb[0].mxu0
        %v577 = vadd.f32 %v441, %v576
        %v578 = vpop.f32.mrb[0].mxu0
        %v579 = vadd.f32 %v441, %v578
        %580 = vdwg.mxu0
        %v581 = vmax.f32 %v535, 0.0
        %v582 = vmax.f32 %v537, 0.0
        %v583 = vmax.f32 %v541, 0.0
        %v584 = vmax.f32 %v543, 0.0
        %v585 = vmax.f32 %v547, 0.0
        %v586 = vmax.f32 %v549, 0.0
        %v587 = vmax.f32 %v553, 0.0
        %v588 = vmax.f32 %v555, 0.0
        %v589 = vtanh.pop %v559
        %v590 = vtanh.pop %v561
        %v591 = vtanh.pop %v565
        %v592 = vtanh.pop %v567
        %v593 = vtanh.pop %v571
        %v594 = vtanh.pop %v573
        %v595 = vtanh.pop %v577
        %v596 = vtanh.pop %v579
        %v597 = vld [vmem:[%s5] sm:$0xf]
        %v598 = vld [vmem:[%s6] sm:$0xf]
        %600 = vset.pattern.permute.xlu0 0
        %601 = vperm.xlu0 %600, %v598
        %v602 = vpop.permute.xlu0 %601
        %vm604 = vcmask 523264
        %v606 = vsel %vm604, %v597, 0
        %608 = vmatprep.subr.mxu0 %v582
        %609 = vmatpush1.msra.mxu0 %v581
        %610 = vmatprep.subr.mxu0 %v584
        %611 = vmatpush1.msra.mxu0 %v583
        %612 = vmatprep.subr.mxu0 %v586
        %613 = vmatpush1.msra.mxu0 %v585
        %614 = vmatprep.subr.mxu0 %v588
        %615 = vmatpush1.msra.mxu0 %v587
        %616 = vmatprep.subr.mxu0 %v590
        %617 = vmatpush1.msra.mxu0 %v589
        %618 = vmatprep.subr.mxu0 %v592
        %619 = vmatpush1.msra.mxu0 %v591
        %620 = vmatprep.subr.mxu0 %v594
        %621 = vmatpush1.msra.mxu0 %v593
        %622 = vmatprep.subr.mxu0 %v596
        %623 = vmatpush1.msra.mxu0 %v595
        %624 = vmatprep.subr.mxu0 0.0
        %625 = vmatpush1.msra.mxu0 0.0
        %626 = vmatprep.subr.mxu0 0.0
        %627 = vmatpush1.msra.mxu0 0.0
        %628 = vmatprep.subr.mxu0 0.0
        %629 = vmatpush1.msra.mxu0 0.0
        %630 = vmatprep.subr.mxu0 0.0
        %631 = vmatpush1.msra.mxu0 0.0
        %632 = vmatprep.subr.mxu0 0.0
        %633 = vmatpush1.msra.mxu0 0.0
        %634 = vmatprep.subr.mxu0 0.0
        %635 = vmatpush1.msra.mxu0 0.0
        %636 = vmatprep.subr.mxu0 0.0
        %637 = vmatpush1.msra.mxu0 0.0
        %638 = vmatprep.subr.mxu0 0.0
        %639 = vmatpush1.msra.mxu0 0.0
        %640 = vmatprep.subr.mxu0 0.0
        %641 = vmatpush1.msra.mxu0 0.0
        %642 = vmatprep.subr.mxu0 0.0
        %643 = vmatpush1.msra.mxu0 0.0
        %644 = vmatprep.subr.mxu0 0.0
        %645 = vmatpush1.msra.mxu0 0.0
        %646 = vmatprep.subr.mxu0 0.0
        %647 = vmatpush1.msra.mxu0 0.0
        %648 = vmatprep.subr.mxu0 0.0
        %649 = vmatpush1.msra.mxu0 0.0
        %650 = vmatprep.subr.mxu0 0.0
        %651 = vmatpush1.msra.mxu0 0.0
        %652 = vmatprep.subr.mxu0 0.0
        %653 = vmatpush1.msra.mxu0 0.0
        %654 = vmatprep.subr.mxu0 0.0
        %655 = vmatpush1.msra.mxu0 0.0
        %656 = vmatprep.subr.mxu0 0.0
        %657 = vmatpush1.msra.mxu0 0.0
        %658 = vmatprep.subr.mxu0 0.0
        %659 = vmatpush1.msra.mxu0 0.0
        %660 = vmatprep.subr.mxu0 0.0
        %661 = vmatpush1.msra.mxu0 0.0
        %662 = vmatprep.subr.mxu0 0.0
        %663 = vmatpush1.msra.mxu0 0.0
        %664 = vmatprep.subr.mxu0 0.0
        %665 = vmatpush1.msra.mxu0 0.0
        %666 = vmatprep.subr.mxu0 0.0
        %667 = vmatpush1.msra.mxu0 0.0
        %668 = vmatprep.subr.mxu0 0.0
        %669 = vmatpush1.msra.mxu0 0.0
        %670 = vmatprep.subr.mxu0 0.0
        %671 = vmatpush1.msra.mxu0 0.0
        %672 = vmatprep.mubr.f32.mxu0 0.0
        %673 = vmatmul.mubr.f32.gmra.mrb[0].mxu0 %v606
        %v674 = vpop.f32.mrb[0].mxu0
        %v675 = vadd.f32 %v602, %v674
        %v676 = vpop.f32.mrb[0].mxu0
        %v677 = vadd.f32 %v602, %v676
        %678 = vdwg.mxu0
        %v681 = vcombine.low %v675, %v677
        %683 = vst [vmem:[%s271] sm:$0xff] %v681
        %s684 = sand.u32 %s181, 1
        %s685 = scalar_lea.sflag [#allocation3], %s684
        %s686 = sand.u32 %s181, 1
        %s687 = smul.addr %s686, 8
        %s688 = scalar_lea.vmem [#allocation2], %s687
        // Predicated region
        $region49: #{tpu_custom_call.1} parent=47 // pred_check
          %p689 = pneg %p191
        $region50: #{tpu_custom_call.1} parent=47 // pred_check_branch
          %691 = sbr.rel (%p689) target = $region52
        $region51: #{tpu_custom_call.1} parent=47 // pred_region
          %s693 = ssub.s32 128, 128
          %694 = vsyncadd %s685, %s693
          %s695 = smul.addr %s21, 2
          %s696 = smul.addr %s695, 64
          %s697 = scalar_lea.hbm %s7, %s696
          %s699 = sshll.u32 %s688, 4
          %s700 = int_to_ptr.vmem [resolvable:$true] %s699
          %702 = dma.vmem_to_hbm [thread:$0]  %s700, 128, %s697, %s685
        $region52: #{tpu_custom_call.1} parent=47 // pred_fallthru
          _
      $region48: #{tpu_custom_call.1} parent=5 // pred_fallthru
        _
      %p703 = scmp.le.s32.totalorder 2, %s16
      // Predicated region
      $region53: #{tpu_custom_call.1} parent=5 // pred_check
        %p704 = pneg %p703
      $region54: #{tpu_custom_call.1} parent=5 // pred_check_branch
        %706 = sbr.rel (%p704) target = $region56
      $region55: #{tpu_custom_call.1} parent=5 // pred_region
        %s707 = ssub.s32 %s16, 2
        // Predicated region
        $region57: #{tpu_custom_call.1} parent=55 // pred_check
          %p708 = pneg %p197
        $region58: #{tpu_custom_call.1} parent=55 // pred_check_branch
          %710 = sbr.rel (%p708) target = $region60
        $region59: #{tpu_custom_call.1} parent=55 // pred_region
          %s711 = sand.u32 %s182, 1
          %s712 = scalar_lea.sflag [#allocation3], %s711
          %s713 = sand.u32 %s182, 1
          %s714 = smul.addr %s713, 8
          %s715 = scalar_lea.vmem [#allocation2], %s714
          %716 = dma.done %s712, 128
        $region60: #{tpu_custom_call.1} parent=55 // pred_fallthru
          _
      $region56: #{tpu_custom_call.1} parent=5 // pred_fallthru
        _
    $region6: #{tpu_custom_call.1} parent=1 // loop_footer
      %s20 = sadd.s32 1, %s16
    $region7: #{tpu_custom_call.1} parent=1 // loop_footer_branch
      %15 = sbr.rel target = $region3
    $region8: #{tpu_custom_call.1} parent=1 // loop_exit
      _
    %717 = vsyncpa [#allocation3], 1
    %s718 = scalar_lea.sflag [#allocation3], 1
    %719 = vsyncpa %s718, 1

</llo_original>
